<compile_context>
chip_gen: v5e
topology: v5e:2x2
jax: 0.10.0
libtpu: 0.0.40
codegen_flags: <defaults>
</compile_context>

<pallas_src>
import jax
import jax.numpy as jnp
from jax import lax
from jax.experimental import pallas as pl
from jax.experimental.pallas import tpu as pltpu

LANE = 128
MAX_TILE_ROWS = 2048  # 2048 x 128 f32 = 1 MiB per block: near HBM roofline on
                      # v5e/v6e/v7x, and double-buffered in+out (pass 2) stays
                      # well under v7x's 32 MiB default scoped VMEM.


# ---------------------------------------------------------------------------
# Pass 1: global min / max  ->  [scale, offset] in SMEM
# ---------------------------------------------------------------------------
def _make_minmax_kernel(tile_rows, n_valid, needs_mask, lower_bound, upper_bound):
    def kernel(x_ref, so_ref, min_sc, max_sc):
        i = pl.program_id(0)

        @pl.when(i == 0)
        def _():
            min_sc[...] = jnp.full_like(min_sc, jnp.inf)
            max_sc[...] = jnp.full_like(max_sc, -jnp.inf)

        x = x_ref[...].astype(jnp.float32)

        if needs_mask:
            # Mask the ragged tail (and any garbage rows of a partial block).
            row0 = i * tile_rows
            row_ids = row0 + lax.broadcasted_iota(jnp.int32, (tile_rows, LANE), 0)
            lane_ids = lax.broadcasted_iota(jnp.int32, (tile_rows, LANE), 1)
            full_rows = n_valid // LANE
            tail = n_valid % LANE
            valid = row_ids < full_rows
            if tail:
                valid = valid | ((row_ids == full_rows) & (lane_ids < tail))
            x_for_min = jnp.where(valid, x, jnp.inf)
            x_for_max = jnp.where(valid, x, -jnp.inf)
        else:
            x_for_min = x
            x_for_max = x

        # Fold (tile_rows, 128) -> (8, 128) with elementwise vreg min/max only.
        fold_min = jnp.min(x_for_min.reshape(tile_rows // 8, 8, LANE), axis=0)
        fold_max = jnp.max(x_for_max.reshape(tile_rows // 8, 8, LANE), axis=0)
        min_sc[...] = jnp.minimum(min_sc[...], fold_min)
        max_sc[...] = jnp.maximum(max_sc[...], fold_max)

        @pl.when(i == pl.num_programs(0) - 1)
        def _():
            x_min = jnp.min(min_sc[...])
            x_max = jnp.max(max_sc[...])
            denom = x_max - x_min
            is_const = denom == 0.0
            safe_denom = jnp.where(is_const, 1.0, denom)
            scale = jnp.where(is_const, 0.0,
                              (upper_bound - lower_bound) / safe_denom)
            offset = jnp.where(is_const, lower_bound,
                               lower_bound - x_min * scale)
            so_ref[0, 0] = scale
            so_ref[0, 1] = offset

    return kernel


# ---------------------------------------------------------------------------
# Pass 2: elementwise rescale (single FMA per vreg)
# ---------------------------------------------------------------------------
def _scale_kernel(so_ref, x_ref, o_ref):
    scale = so_ref[0, 0]
    offset = so_ref[0, 1]
    x = x_ref[...].astype(jnp.float32)
    o_ref[...] = (x * scale + offset).astype(o_ref.dtype)


# ---------------------------------------------------------------------------
# Wrapper
# ---------------------------------------------------------------------------
def min_max_scale(x, lower_bound=0.01, upper_bound=0.99):
    orig_shape = x.shape
    orig_dtype = x.dtype
    n = int(x.size)
    if n == 0:
        return x  # nothing to scale (torch .min() would error here)

    # Keep bf16/f32 in native width through HBM (halves traffic for bf16);
    # anything else is processed as f32.  Accumulation is always f32 in-kernel.
    if orig_dtype in (jnp.float32, jnp.bfloat16):
        io_dtype = orig_dtype
    else:
        io_dtype = jnp.float32
    sublane = 16 if io_dtype == jnp.bfloat16 else 8

    flat = x.reshape(-1)
    if flat.dtype != io_dtype:
        flat = flat.astype(io_dtype)

    rows = -(-n // LANE)
    rows_padded = -(-rows // sublane) * sublane
    padded_n = rows_padded * LANE
    if padded_n != n:
        # Rare non-lane-aligned case only; pad value is irrelevant because the
        # reduction masks the tail in-kernel.
        flat = jnp.pad(flat, (0, padded_n - n))
    x2d = flat.reshape(rows_padded, LANE)

    tile_rows = min(rows_padded, MAX_TILE_ROWS)
    num_blocks = -(-rows_padded // tile_rows)
    covered = num_blocks * tile_rows * LANE
    needs_mask = covered != n

    # ---- Pass 1: global min/max folded into [scale, offset] ----------------
    # NOTE: on v7x an extra ~2x is available by sharding this reduction over
    # the 2 TensorCores (leading "parallel" axis with per-core partials).
    scale_offset = pl.pallas_call(
        _make_minmax_kernel(tile_rows, n, needs_mask,
                            float(lower_bound), float(upper_bound)),
        out_shape=jax.ShapeDtypeStruct((1, 2), jnp.float32),
        grid_spec=pltpu.PrefetchScalarGridSpec(
            num_scalar_prefetch=0,
            grid=(num_blocks,),
            in_specs=[pl.BlockSpec((tile_rows, LANE), lambda i: (i, 0))],
            out_specs=pl.BlockSpec((1, 2), lambda i: (0, 0),
                                   memory_space=pltpu.SMEM),
            scratch_shapes=[pltpu.VMEM((8, LANE), jnp.float32),
                            pltpu.VMEM((8, LANE), jnp.float32)],
        ),
        compiler_params=pltpu.CompilerParams(
            dimension_semantics=("arbitrary",)),
    )(x2d)

    # ---- Pass 2: elementwise rescale ----------------------------------------
    y2d = pl.pallas_call(
        _scale_kernel,
        out_shape=jax.ShapeDtypeStruct((rows_padded, LANE), io_dtype),
        grid_spec=pltpu.PrefetchScalarGridSpec(
            num_scalar_prefetch=0,
            grid=(num_blocks,),
            in_specs=[
                pl.BlockSpec(memory_space=pltpu.SMEM),
                pl.BlockSpec((tile_rows, LANE), lambda i: (i, 0)),
            ],
            out_specs=pl.BlockSpec((tile_rows, LANE), lambda i: (i, 0)),
        ),
        compiler_params=pltpu.CompilerParams(
            dimension_semantics=("parallel",)),
    )(scale_offset, x2d)

    y = y2d.reshape(-1)
    if padded_n != n:
        y = y[:n]
    return y.reshape(orig_shape).astype(orig_dtype)


# ---------------------------------------------------------------------------
# Main
# ---------------------------------------------------------------------------
if __name__ == "__main__":
    key = jax.random.PRNGKey(0)
    # NCHW input, as the module would typically receive.
    x = jax.random.normal(key, (2, 4, 16, 16), dtype=jnp.float32) * 3.0 + 1.5

    y = jax.block_until_ready(min_max_scale(x, lower_bound=0.01, upper_bound=0.99))

    # Pure-JAX reference for sanity.
    def ref_fn(v, lb=0.01, ub=0.99):
        v_min, v_max = jnp.min(v), jnp.max(v)
        return jnp.where(v_min == v_max,
                         jnp.full_like(v, lb),
                         lb + (v - v_min) * (ub - lb) / (v_max - v_min))

    assert jnp.allclose(y, ref_fn(x), atol=1e-5, rtol=1e-5), "mismatch vs reference"

    # Degenerate (constant-input) branch check.
    xc = jnp.full((2, 4, 16, 16), 7.0, dtype=jnp.float32)
    yc = jax.block_until_ready(min_max_scale(xc))
    assert jnp.allclose(yc, jnp.full_like(xc, 0.01)), "constant-input mismatch"

    # Ragged size (not a multiple of 128) exercises the in-kernel tail mask.
    xr = jax.random.normal(jax.random.PRNGKey(1), (3, 5, 7), dtype=jnp.float32)
    yr = jax.block_until_ready(min_max_scale(xr))
    assert jnp.allclose(yr, ref_fn(xr), atol=1e-5, rtol=1e-5), "ragged mismatch"

    print("KERNEL_OK")
</pallas_src>

<mosaic_0001>
module attributes {stable_mosaic.version = 11 : i64} {
  func.func @kernel(%arg0: i32, %arg1: memref<16x128xf32, #tpu.memory_space<vmem>>, %arg2: memref<1x2xf32, #tpu.memory_space<smem>>, %arg3: memref<8x128xf32, #tpu.memory_space<vmem>>, %arg4: memref<8x128xf32, #tpu.memory_space<vmem>>) attributes {dimension_semantics = [#tpu.dimension_semantics<arbitrary>], iteration_bounds = array<i64: 1>, scalar_prefetch = 0 : i64, scratch_operands = 2 : i64, tpu.core_type = #tpu.core_type<tc>, window_params = [{transform_indices = @transform_0, window_bounds = array<i64: 16, 128>}, {transform_indices = @transform_1, window_bounds = array<i64: 1, 2>}]} {
    %c0_i32 = arith.constant 0 : i32
    %0 = arith.cmpi eq, %arg0, %c0_i32 : i32
    %1 = arith.extui %0 : i1 to i32
    %c0_i32_0 = arith.constant 0 : i32
    %2 = arith.cmpi ne, %1, %c0_i32_0 : i32
    scf.if %2 {
      %cst_13 = arith.constant 0x7F800000 : f32
      %17 = vector.broadcast %cst_13 : f32 to vector<8x128xf32>
      %c0_14 = arith.constant 0 : index
      %c0_15 = arith.constant 0 : index
      %18 = vector.load %arg3[%c0_14, %c0_15] : memref<8x128xf32, #tpu.memory_space<vmem>>, vector<8x128xf32>
      tpu.vector_store %arg3[%c0_14, %c0_15], %17 {strides = array<i32>} : memref<8x128xf32, #tpu.memory_space<vmem>>, vector<8x128xf32>,
      %cst_16 = arith.constant 0xFF800000 : f32
      %19 = vector.broadcast %cst_16 : f32 to vector<8x128xf32>
      %c0_17 = arith.constant 0 : index
      %c0_18 = arith.constant 0 : index
      %20 = vector.load %arg4[%c0_17, %c0_18] : memref<8x128xf32, #tpu.memory_space<vmem>>, vector<8x128xf32>
      tpu.vector_store %arg4[%c0_17, %c0_18], %19 {strides = array<i32>} : memref<8x128xf32, #tpu.memory_space<vmem>>, vector<8x128xf32>,
    } else {
    }
    %c0 = arith.constant 0 : index
    %c0_1 = arith.constant 0 : index
    %3 = vector.load %arg1[%c0, %c0_1] : memref<16x128xf32, #tpu.memory_space<vmem>>, vector<16x128xf32>
    %4 = vector.shape_cast %3 : vector<16x128xf32> to vector<2x8x128xf32>
    %cst = arith.constant dense<0x7F800000> : vector<8x128xf32>
    %5 = vector.multi_reduction <minimumf>, %4, %cst [0] : vector<2x8x128xf32> to vector<8x128xf32>
    %6 = vector.shape_cast %3 : vector<16x128xf32> to vector<2x8x128xf32>
    %cst_2 = arith.constant dense<0xFF800000> : vector<8x128xf32>
    %7 = vector.multi_reduction <maximumf>, %6, %cst_2 [0] : vector<2x8x128xf32> to vector<8x128xf32>
    %c0_3 = arith.constant 0 : index
    %c0_4 = arith.constant 0 : index
    %8 = vector.load %arg3[%c0_3, %c0_4] : memref<8x128xf32, #tpu.memory_space<vmem>>, vector<8x128xf32>
    %9 = arith.minimumf %8, %5 : vector<8x128xf32>
    %c0_5 = arith.constant 0 : index
    %c0_6 = arith.constant 0 : index
    %10 = vector.load %arg3[%c0_5, %c0_6] : memref<8x128xf32, #tpu.memory_space<vmem>>, vector<8x128xf32>
    tpu.vector_store %arg3[%c0_5, %c0_6], %9 {strides = array<i32>} : memref<8x128xf32, #tpu.memory_space<vmem>>, vector<8x128xf32>,
    %c0_7 = arith.constant 0 : index
    %c0_8 = arith.constant 0 : index
    %11 = vector.load %arg4[%c0_7, %c0_8] : memref<8x128xf32, #tpu.memory_space<vmem>>, vector<8x128xf32>
    %12 = arith.maximumf %11, %7 : vector<8x128xf32>
    %c0_9 = arith.constant 0 : index
    %c0_10 = arith.constant 0 : index
    %13 = vector.load %arg4[%c0_9, %c0_10] : memref<8x128xf32, #tpu.memory_space<vmem>>, vector<8x128xf32>
    tpu.vector_store %arg4[%c0_9, %c0_10], %12 {strides = array<i32>} : memref<8x128xf32, #tpu.memory_space<vmem>>, vector<8x128xf32>,
    %c0_i32_11 = arith.constant 0 : i32
    %14 = arith.cmpi eq, %arg0, %c0_i32_11 : i32
    %15 = arith.extui %14 : i1 to i32
    %c0_i32_12 = arith.constant 0 : i32
    %16 = arith.cmpi ne, %15, %c0_i32_12 : i32
    scf.if %16 {
      %c0_13 = arith.constant 0 : index
      %c0_14 = arith.constant 0 : index
      %17 = vector.load %arg3[%c0_13, %c0_14] : memref<8x128xf32, #tpu.memory_space<vmem>>, vector<8x128xf32>
      %18 = vector.shape_cast %17 : vector<8x128xf32> to vector<1x8x128xf32>
      %cst_15 = arith.constant dense<0x7F800000> : vector<1xf32>
      %19 = vector.multi_reduction <minimumf>, %18, %cst_15 [1, 2] : vector<1x8x128xf32> to vector<1xf32>
      %20 = vector.shape_cast %19 : vector<1xf32> to vector<1x1x1xf32>
      %21 = vector.extract %20[0, 0, 0] : f32 from vector<1x1x1xf32>
      %c0_16 = arith.constant 0 : index
      %c0_17 = arith.constant 0 : index
      %22 = vector.load %arg4[%c0_16, %c0_17] : memref<8x128xf32, #tpu.memory_space<vmem>>, vector<8x128xf32>
      %23 = vector.shape_cast %22 : vector<8x128xf32> to vector<1x8x128xf32>
      %cst_18 = arith.constant dense<0xFF800000> : vector<1xf32>
      %24 = vector.multi_reduction <maximumf>, %23, %cst_18 [1, 2] : vector<1x8x128xf32> to vector<1xf32>
      %25 = vector.shape_cast %24 : vector<1xf32> to vector<1x1x1xf32>
      %26 = vector.extract %25[0, 0, 0] : f32 from vector<1x1x1xf32>
      %27 = arith.subf %26, %21 : f32
      %cst_19 = arith.constant 0.000000e+00 : f32
      %28 = arith.cmpf oeq, %27, %cst_19 : f32
      %cst_20 = arith.constant 1.000000e+00 : f32
      %29 = arith.select %28, %cst_20, %27 : f32
      %cst_21 = arith.constant 9.800000e-01 : f32
      %30 = arith.divf %cst_21, %29 : f32
      %cst_22 = arith.constant 0.000000e+00 : f32
      %31 = arith.select %28, %cst_22, %30 : f32
      %32 = arith.mulf %21, %31 : f32
      %cst_23 = arith.constant 0.00999999977 : f32
      %33 = arith.subf %cst_23, %32 : f32
      %cst_24 = arith.constant 0.00999999977 : f32
      %34 = arith.select %28, %cst_24, %33 : f32
      %c0_25 = arith.constant 0 : index
      %c0_26 = arith.constant 0 : index
      %35 = memref.load %arg2[%c0_25, %c0_26] : memref<1x2xf32, #tpu.memory_space<smem>>
      memref.store %31, %arg2[%c0_25, %c0_26] : memref<1x2xf32, #tpu.memory_space<smem>>
      %c0_27 = arith.constant 0 : index
      %c1 = arith.constant 1 : index
      %36 = memref.load %arg2[%c0_27, %c1] : memref<1x2xf32, #tpu.memory_space<smem>>
      memref.store %34, %arg2[%c0_27, %c1] : memref<1x2xf32, #tpu.memory_space<smem>>
    } else {
    }
    return
  }
  func.func @transform_0(%arg0: i32) -> (i32, i32) {
    %c0_i32 = arith.constant 0 : i32
    %c0_i32_0 = arith.constant 0 : i32
    return %arg0, %c0_i32 : i32, i32
  }
  func.func @transform_1(%arg0: i32) -> (i32, i32) {
    %c0_i32 = arith.constant 0 : i32
    %c0_i32_0 = arith.constant 0 : i32
    %c0_i32_1 = arith.constant 0 : i32
    return %c0_i32, %c0_i32_0 : i32, i32
  }
}

</mosaic_0001>

<llo_original>
// kernel: tpu_custom_call.1
$region0: #{tpu_custom_call.1}
  #allocation0 [shape = 'u32[]', space=smem, size = 0x4, offset = 0x4, fixed_abs, tag = 'smem constant byte address 0x4 - core index']
  #allocation1 [shape = 'u32[72,128]{1,0:T(1,128)}', space=vmem, size = 0x9000, scoped, tag = 'internal scratch']
  #allocation2 [shape = 'f32[8,128]{1,0:T(8,128)}', space=vmem, size = 0x1000, scoped, tag = 'scratch operand']
  #allocation3 [shape = 'f32[8,128]{1,0:T(8,128)}', space=vmem, size = 0x1000, scoped, tag = 'scratch operand']
  %s0 = inlined_call_operand.hbm [shape: f32[16,128], index: 0, kind: input, shape index: {}]
  %s1 = inlined_call_operand.hbm [shape: f32[1,2], index: 1, kind: output, shape index: {}]
  %s2 = sld [smem:[#allocation0]]
  $region26: #{tpu_custom_call.1} parent=0
    _
  %s4 = ssub.s32 1, %s2
  %s5 = scalar_select 0, %s4, %s2
  $region1: #{tpu_custom_call.1} parent=0
    #allocation4 [shape = 'u8[8192]{0}', space=vmem, size = 0x2000, scoped, tag = 'input window, operand 0, single buffered']
    #allocation5 [shape = 's32[1]{0}', space=sflag, size = 0x4, scoped, tag = 'scoped memory for tpu_custom_call.1']
    #allocation6 [shape = 's32[1]{0}', space=sflag, size = 0x4, scoped, tag = 'scoped memory for tpu_custom_call.1']
    #allocation7 [shape = 'u8[512]{0}', space=smem, size = 0x200, scoped, tag = 'output window, operand 0, single buffered']
    %6 = vsyncpa [#allocation5], 0
    %7 = vsyncpa [#allocation6], 0
    // Predicated region
    $region2: #{tpu_custom_call.1} parent=1 // pred_check
      _
    $region3: #{tpu_custom_call.1} parent=1 // pred_check_branch
      %9 = sbr.rel (0) target = $region5
    $region4: #{tpu_custom_call.1} parent=1 // pred_region
      %11 = vsyncadd [#allocation5], 0
      %s12 = sshll.u32 %s0, 4
      %s13 = int_to_ptr.hbm [resolvable:$true] %s12
      %s14 = sshll.u32 [#allocation4], 4
      %s15 = int_to_ptr.vmem [resolvable:$true] %s14
      %20 = dma.hbm_to_vmem [thread:$0]  %s13, 256, %s15, [#allocation5], 128, 128, 8
    $region5: #{tpu_custom_call.1} parent=1 // pred_fallthru
      _
    // Predicated region
    $region6: #{tpu_custom_call.1} parent=1 // pred_check
      _
    $region7: #{tpu_custom_call.1} parent=1 // pred_check_branch
      %22 = sbr.rel (0) target = $region9
    $region8: #{tpu_custom_call.1} parent=1 // pred_region
      %24 = dma.done [#allocation5], 256
    $region9: #{tpu_custom_call.1} parent=1 // pred_fallthru
      _
    %p25 = scmp.eq.s32.totalorder 0, 0
    // Predicated region
    $region10: #{tpu_custom_call.1} parent=1 // pred_check
      %p26 = pneg %p25
    $region11: #{tpu_custom_call.1} parent=1 // pred_check_branch
      %28 = sbr.rel (%p26) target = $region13
    $region12: #{tpu_custom_call.1} parent=1 // pred_region
      %29 = vst [vmem:[#allocation2] sm:$0xff] inf
      %30 = vst [vmem:[#allocation3] sm:$0xff] -inf
    $region13: #{tpu_custom_call.1} parent=1 // pred_fallthru
      _
    %v31 = vld [vmem:[#allocation4] sm:$0xff]
    %v32 = vld [vmem:[#allocation4 + $0x8] sm:$0xff]
    %v33 = vmin.f32 %v31, %v32
    %v34 = vmax.f32 %v31, %v32
    %v35 = vld [vmem:[#allocation2] sm:$0xff]
    %v36 = vmin.f32 %v35, %v33
    %37 = vst [vmem:[#allocation2] sm:$0xff] %v36
    %v38 = vld [vmem:[#allocation3] sm:$0xff]
    %v39 = vmax.f32 %v38, %v34
    %40 = vst [vmem:[#allocation3] sm:$0xff] %v39
    // Predicated region
    $region14: #{tpu_custom_call.1} parent=1 // pred_check
      %p41 = pneg %p25
    $region15: #{tpu_custom_call.1} parent=1 // pred_check_branch
      %43 = sbr.rel (%p41) target = $region17
    $region16: #{tpu_custom_call.1} parent=1 // pred_region
      %v44 = vld [vmem:[#allocation2] sm:$0xff]
      %45 = vmin.xlane.f32.xlu0 %v44
      %v46 = vpop.xlane.xlu0 %45
      %v47 = vrot.slane %v46, 4
      %v48 = vmin.f32 %v46, %v47
      %v49 = vrot.slane %v48, 2
      %v50 = vmin.f32 %v48, %v49
      %v51 = vrot.slane %v50, 1
      %v52 = vmin.f32 %v50, %v51
      %s53 = vtos %v52
      %v54 = vld [vmem:[#allocation3] sm:$0xff]
      %55 = vmax.xlane.f32.xlu0 %v54
      %v56 = vpop.xlane.xlu0 %55
      %v57 = vrot.slane %v56, 4
      %v58 = vmax.f32 %v56, %v57
      %v59 = vrot.slane %v58, 2
      %v60 = vmax.f32 %v58, %v59
      %v61 = vrot.slane %v60, 1
      %v62 = vmax.f32 %v60, %v61
      %s63 = vtos %v62
      %s64 = ssub.f32 %s63, %s53
      %p65 = scmp.eq.f32.partialorder %s64, 0.0
      %s66 = scalar_select %p65, 1.0, %s64
      %v67 = vstv %s66
      %v68 = vrcp.pop %v67
      %v69 = vmul.f32 %v67, %v68
      %v70 = vsub.f32 1.0, %v69
      %v71 = vmul.f32 %v68, %v70
      %v72 = vadd.f32 %v68, %v71
      %vm73 = vweird.f32 %v67
      %vm74 = vweird.f32 %v68
      %vm75 = vmor %vm73, %vm74
      %v76 = vsel %vm75, %v68, %v72
      %v77 = vand.u32 2147483647, %v67
      %vm78 = vcmp.eq.f32.partialorder %v77, 8.507059e+37
      %v79 = vand.u32 %v67, 2147483648
      %v80 = vor.u32 1.1754944e-38, %v79
      %v81 = vsel %vm78, %v80, %v76
      %s82 = vtos %v81
      %s83 = smul.f32 0.98, %s82
      %s84 = scalar_select %p65, 0.0, %s83
      %s85 = smul.f32 %s53, %s84
      %s86 = ssub.f32 0.01, %s85
      %s87 = scalar_select %p65, 0.01, %s86
      %s88 = scalar_lea.smem [#allocation7], 0
      %89 = sst [smem:[%s88]] %s84
      %s90 = scalar_lea.smem [#allocation7], 1
      %91 = sst [smem:[%s90]] %s87
    $region17: #{tpu_custom_call.1} parent=1 // pred_fallthru
      _
    // Predicated region
    $region18: #{tpu_custom_call.1} parent=1 // pred_check
      _
    $region19: #{tpu_custom_call.1} parent=1 // pred_check_branch
      %93 = sbr.rel (0) target = $region21
    $region20: #{tpu_custom_call.1} parent=1 // pred_region
      %95 = vsyncadd [#allocation6], 0
      %s97 = sshll.u32 %s1, 4
      %s98 = int_to_ptr.hbm [resolvable:$true] %s97
      %100 = dma.smem_to_hbm [#allocation7], 16, %s98, [#allocation6]
    $region21: #{tpu_custom_call.1} parent=1 // pred_fallthru
      _
    // Predicated region
    $region22: #{tpu_custom_call.1} parent=1 // pred_check
      _
    $region23: #{tpu_custom_call.1} parent=1 // pred_check_branch
      %102 = sbr.rel (0) target = $region25
    $region24: #{tpu_custom_call.1} parent=1 // pred_region
      %104 = dma.done [#allocation6], 16
    $region25: #{tpu_custom_call.1} parent=1 // pred_fallthru
      _
    %105 = sfence
    %106 = vsyncpa [#allocation5], 1
    %107 = vsyncpa [#allocation6], 1

</llo_original>
